<compile_context>
chip_gen: v7x
topology: tpu7x:2x2x1
jax: 0.10.0
libtpu: 0.0.40
codegen_flags: <defaults>
</compile_context>

<pallas_src>
import functools

import jax
import jax.numpy as jnp
import numpy as np
from jax.experimental import pallas as pl
from jax.experimental.pallas import tpu as pltpu

_LANES = 128
_SUBLANES = 8
_MAX_BLOCK_ROWS = 2048  # 2048 x 128 x 4B = 1 MiB per VMEM buffer


def _cutoff_sigmoid_kernel(x_ref, o_ref, *, lam, cutoff, offset):
    """Elementwise: y = sigmoid(lam*x + offset); y = 0 where y < cutoff."""
    x = x_ref[...].astype(jnp.float32)
    z = lam * x + offset                      # FMA on the VPU
    y = jax.nn.sigmoid(z)                     # transcendental -> EUP slot
    o_ref[...] = jnp.where(y < cutoff, 0.0, y).astype(o_ref.dtype)


@functools.partial(jax.jit, static_argnames=("iteration", "cutoff", "offset"))
def cutoff_sigmoid2(x, iteration: int, cutoff: float = 0.5, offset: float = 0.0):
    """Pallas forward of CutoffSigmoid2. `iteration` is a static Python int."""
    lam = float(1.0 - 0.95 ** (iteration + 1))
    orig_shape = x.shape
    dtype = x.dtype
    n = int(np.prod(orig_shape)) if orig_shape else 1

    # Lane-dense 2D view: (rows, 128), rows padded up to a sublane-aligned tile.
    rows = pl.cdiv(n, _LANES)
    rows8 = ((rows + _SUBLANES - 1) // _SUBLANES) * _SUBLANES
    block_rows = min(_MAX_BLOCK_ROWS, rows8)
    padded_rows = ((rows8 + block_rows - 1) // block_rows) * block_rows
    padded = padded_rows * _LANES

    x_flat = jnp.ravel(x)
    if padded != n:
        x_flat = jnp.pad(x_flat, (0, padded - n))       # padding sliced off below
    x2d = x_flat.reshape(padded_rows, _LANES)

    grid = (padded_rows // block_rows,)
    out2d = pl.pallas_call(
        functools.partial(
            _cutoff_sigmoid_kernel,
            lam=lam, cutoff=float(cutoff), offset=float(offset)),
        out_shape=jax.ShapeDtypeStruct((padded_rows, _LANES), dtype),
        grid=grid,
        in_specs=[pl.BlockSpec((block_rows, _LANES), lambda i: (i, 0))],
        out_specs=pl.BlockSpec((block_rows, _LANES), lambda i: (i, 0)),
        compiler_params=pltpu.CompilerParams(
            dimension_semantics=("parallel",)),          # shard tiles across TCs (v7x)
        cost_estimate=pl.CostEstimate(
            flops=4 * padded,
            transcendentals=padded,
            bytes_accessed=2 * padded * jnp.dtype(dtype).itemsize),
    )(x2d)

    return out2d.reshape(-1)[:n].reshape(orig_shape)


def _reference(x, iteration, cutoff=0.5, offset=0.0):
    """Pure-JAX reference of the PyTorch forward."""
    lam = 1.0 - 0.95 ** (iteration + 1)
    y = jax.nn.sigmoid(lam * x + offset)
    return y - (y < cutoff).astype(y.dtype) * y


if __name__ == "__main__":
    key = jax.random.PRNGKey(0)

    # Shape consistent with the module's typical use (conv activations), small.
    N, C, H, W = 2, 4, 16, 16
    k1, k2 = jax.random.split(key)
    x = jax.random.normal(k1, (N, C, H, W), dtype=jnp.float32) * 2.0 + 0.5

    for it in (0, 3, 50):
        y = jax.block_until_ready(cutoff_sigmoid2(x, iteration=it))
        y_ref = _reference(x, it)
        np.testing.assert_allclose(np.asarray(y), np.asarray(y_ref),
                                   rtol=1e-5, atol=1e-5)

    # Non-multiple-of-128 element count exercises the padding path.
    x_odd = jax.random.normal(k2, (3, 5, 7, 11), dtype=jnp.float32)
    y_odd = jax.block_until_ready(cutoff_sigmoid2(x_odd, iteration=3))
    np.testing.assert_allclose(np.asarray(y_odd), np.asarray(_reference(x_odd, 3)),
                               rtol=1e-5, atol=1e-5)

    print("KERNEL_OK")
</pallas_src>

<mosaic_0001>
module attributes {stable_mosaic.version = 11 : i64} {
  func.func @_cutoff_sigmoid_kernel(%arg0: i32, %arg1: memref<16x128xf32, #tpu.memory_space<vmem>>, %arg2: memref<16x128xf32, #tpu.memory_space<vmem>>) attributes {dimension_semantics = [#tpu.dimension_semantics<parallel>], iteration_bounds = array<i64: 1>, scalar_prefetch = 0 : i64, scratch_operands = 0 : i64, tpu.core_type = #tpu.core_type<tc>, window_params = [{transform_indices = @transform_0, window_bounds = array<i64: 16, 128>}, {transform_indices = @transform_1, window_bounds = array<i64: 16, 128>}]} {
    %c0 = arith.constant 0 : index
    %c0_0 = arith.constant 0 : index
    %0 = vector.load %arg1[%c0, %c0_0] : memref<16x128xf32, #tpu.memory_space<vmem>>, vector<16x128xf32>
    %cst = arith.constant 5.000000e-02 : f32
    %1 = vector.broadcast %cst : f32 to vector<16x128xf32>
    %2 = arith.mulf %1, %0 : vector<16x128xf32>
    %cst_1 = arith.constant 0.000000e+00 : f32
    %3 = vector.broadcast %cst_1 : f32 to vector<16x128xf32>
    %4 = arith.addf %2, %3 : vector<16x128xf32>
    %5 = arith.negf %4 : vector<16x128xf32>
    %6 = math.exp %5 : vector<16x128xf32>
    %cst_2 = arith.constant 1.000000e+00 : f32
    %7 = vector.broadcast %cst_2 : f32 to vector<16x128xf32>
    %8 = arith.addf %7, %6 : vector<16x128xf32>
    %9 = arith.divf %7, %8 : vector<16x128xf32>
    %cst_3 = arith.constant 5.000000e-01 : f32
    %10 = vector.broadcast %cst_3 : f32 to vector<16x128xf32>
    %11 = arith.cmpf olt, %9, %10 : vector<16x128xf32>
    %cst_4 = arith.constant 0.000000e+00 : f32
    %12 = vector.broadcast %cst_4 : f32 to vector<16x128xf32>
    %13 = arith.select %11, %12, %9 : vector<16x128xi1>, vector<16x128xf32>
    %c0_5 = arith.constant 0 : index
    %c0_6 = arith.constant 0 : index
    %14 = vector.load %arg2[%c0_5, %c0_6] : memref<16x128xf32, #tpu.memory_space<vmem>>, vector<16x128xf32>
    tpu.vector_store %arg2[%c0_5, %c0_6], %13 {strides = array<i32>} : memref<16x128xf32, #tpu.memory_space<vmem>>, vector<16x128xf32>,
    return
  }
  func.func @transform_0(%arg0: i32) -> (i32, i32) {
    %c0_i32 = arith.constant 0 : i32
    %c0_i32_0 = arith.constant 0 : i32
    return %arg0, %c0_i32 : i32, i32
  }
  func.func @transform_1(%arg0: i32) -> (i32, i32) {
    %c0_i32 = arith.constant 0 : i32
    %c0_i32_0 = arith.constant 0 : i32
    return %arg0, %c0_i32 : i32, i32
  }
}

</mosaic_0001>

<llo_original>
// kernel: cutoff_sigmoid2.1
$region0: #{cutoff_sigmoid2.1}
  #allocation0 [shape = 'u32[]', space=smem, size = 0x4, offset = 0x4, fixed_abs, tag = 'smem constant byte address 0x4 - core index']
  #allocation1 [shape = 'u32[144,128]{1,0:T(1,128)}', space=vmem, size = 0x12000, scoped, tag = 'internal scratch']
  %s0 = inlined_call_operand.vmem [shape: f32[16,128], index: 0, kind: input, shape index: {}]
  %s1 = inlined_call_operand.vmem [shape: f32[16,128], index: 1, kind: output, shape index: {}]
  %s2 = sld [smem:[#allocation0]]
  $region14: #{cutoff_sigmoid2.1} parent=0
    _
  %s4 = ssub.s32 1, %s2
  %s5 = scalar_select 0, %s4, %s2
  // Predicated region
  $region2: #{cutoff_sigmoid2.1} parent=0 // pred_check
    _
  $region3: #{cutoff_sigmoid2.1} parent=0 // pred_check_branch
    %7 = sbr.rel (0) target = $region5
  $region4: #{cutoff_sigmoid2.1} parent=0 // pred_region
    _
  $region5: #{cutoff_sigmoid2.1} parent=0 // pred_fallthru
    _
  %v8 = vld [vmem:[%s0] sm:$0xff]
  %v9 = vld [vmem:[%s0 + $0x8] sm:$0xff]
  %v10 = vmul.f32 %v8, 0.05
  %v11 = vmul.f32 %v9, 0.05
  %v12 = vadd.f32 %v10, 0.0
  %v13 = vadd.f32 %v11, 0.0
  %v14 = vxor.u32 %v12, 2147483648
  %v15 = vxor.u32 %v13, 2147483648
  %v16 = vmul.f32 %v14, 1.442695
  %v17 = vpow.pop %v16
  %v18 = vmul.f32 %v15, 1.442695
  %v19 = vpow.pop %v18
  %v20 = vadd.f32 %v17, 1.0
  %v21 = vadd.f32 %v19, 1.0
  %v22 = vrcp.pop %v20
  %v23 = vmul.f32 1.0, %v22
  %v24 = vrcp.pop %v21
  %v25 = vmul.f32 1.0, %v24
  %vm26 = vcmp.lt.f32.partialorder %v23, 0.5
  %vm27 = vcmp.lt.f32.partialorder %v25, 0.5
  %v28 = vsel %vm26, 0.0, %v23
  %v29 = vsel %vm27, 0.0, %v25
  %30 = vst [vmem:[%s1] sm:$0xff] %v28
  %31 = vst [vmem:[%s1 + $0x8] sm:$0xff] %v29
  // Predicated region
  $region6: #{cutoff_sigmoid2.1} parent=0 // pred_check
    _
  $region7: #{cutoff_sigmoid2.1} parent=0 // pred_check_branch
    %33 = sbr.rel (0) target = $region9
  $region8: #{cutoff_sigmoid2.1} parent=0 // pred_region
    _
  $region9: #{cutoff_sigmoid2.1} parent=0 // pred_fallthru
    _
  // Predicated region
  $region10: #{cutoff_sigmoid2.1} parent=0 // pred_check
    _
  $region11: #{cutoff_sigmoid2.1} parent=0 // pred_check_branch
    %35 = sbr.rel (0) target = $region13
  $region12: #{cutoff_sigmoid2.1} parent=0 // pred_region
    _
  $region13: #{cutoff_sigmoid2.1} parent=0 // pred_fallthru
    _

</llo_original>
